<compile_context>
chip_gen: v7x
topology: tpu7x:2x2x1
jax: 0.10.0
libtpu: 0.0.40
codegen_flags: <defaults>
</compile_context>

<pallas_src>
import functools

import jax
import jax.numpy as jnp
import numpy as np
from jax import lax
from jax.experimental import pallas as pl
from jax.experimental.pallas import tpu as pltpu

_LANE = 128
_SUBLANE = 8
_MiB = 1 << 20


def _rec_loss_kernel(x_ref, xr_ref, sum_ref, cnt_ref, *, fc, tile_s):
    """Grid = (B, chunks). Refs: x/xr (tile_s,128) native dtype; sum/cnt (8,128) f32."""
    c = pl.program_id(1)

    @pl.when(c == 0)
    def _():
        sum_ref[...] = jnp.zeros_like(sum_ref)
        cnt_ref[...] = jnp.zeros_like(cnt_ref)

    x = x_ref[...]                     # (tile_s, 128), native dtype
    xr = xr_ref[...]

    nz = x != 0
    if fc % tile_s != 0:
        # Tail chunk extends past the true extent; Pallas does not zero-fill OOB
        # block regions, so mask rows >= fc explicitly.
        rows = c * tile_s + lax.broadcasted_iota(jnp.int32, (tile_s, _LANE), 0)
        nz = jnp.logical_and(nz, rows < fc)

    diff = jnp.abs(x.astype(jnp.float32) - xr.astype(jnp.float32))
    masked = jnp.where(nz, diff, 0.0)
    ones = jnp.where(nz, 1.0, 0.0)

    g = tile_s // _SUBLANE
    if g == 1:
        sum_ref[...] += masked
        cnt_ref[...] += ones
    else:
        # (tile_s,128) -> (g,8,128) is a pure reinterpretation of the native sublane
        # tiling; the axis-0 sum is vreg-wise VPU adds (no cross-lane XLU work).
        sum_ref[...] += jnp.sum(masked.reshape(g, _SUBLANE, _LANE), axis=0)
        cnt_ref[...] += jnp.sum(ones.reshape(g, _SUBLANE, _LANE), axis=0)


def reconstruction_loss(x_rec, x, *, max_tile_s=None):
    """Pallas port of Reconstruction_Loss.forward(x_rec, x). Returns an f32 scalar."""
    B = x.shape[0]
    x_flat = x.reshape(B, -1)
    xr_flat = x_rec.reshape(B, -1)
    F = x_flat.shape[1]
    assert xr_flat.shape[1] == F, "x_rec and x must flatten to the same per-row size"

    if F % _LANE != 0:
        # TODO(synk): fully pad-free ragged-F path; this pads at most 127 columns
        # (one extra HBM pass only in the misaligned case). Padded zeros are masked
        # out by (x != 0), so semantics are preserved.
        pad = _LANE - F % _LANE
        x_flat = jnp.pad(x_flat, ((0, 0), (0, pad)))
        xr_flat = jnp.pad(xr_flat, ((0, 0), (0, pad)))
    fc = x_flat.shape[1] // _LANE      # number of 128-lane rows per batch row

    x3 = x_flat.reshape(B, fc, _LANE)
    xr3 = xr_flat.reshape(B, fc, _LANE)

    # --- generation-aware tile sizing (kernel is HBM-bandwidth bound) ---
    try:
        vmem_cap = int(pltpu.get_tpu_info().vmem_capacity_bytes)
    except Exception:  # pragma: no cover - conservative default (v7x: 64 MiB/core)
        vmem_cap = 64 * _MiB
    # Total input buffering budget (2 inputs x double buffer), leaving headroom for
    # Mosaic internal scratch: ~24 MiB on v7x, ~48 MiB on v5e/v6e.
    buf_budget = min(max(vmem_cap // 2 - 8 * _MiB, 4 * _MiB), 48 * _MiB)
    per_block_bytes = buf_budget // 4
    itemsize = max(x3.dtype.itemsize, xr3.dtype.itemsize)
    tile_s = per_block_bytes // (_LANE * itemsize)
    tile_s = max(_SUBLANE, (tile_s // _SUBLANE) * _SUBLANE)
    fc_pad8 = ((fc + _SUBLANE - 1) // _SUBLANE) * _SUBLANE
    tile_s = min(tile_s, fc_pad8)
    if max_tile_s is not None:
        tile_s = min(tile_s, max(_SUBLANE, (max_tile_s // _SUBLANE) * _SUBLANE))

    num_chunks = -(-fc // tile_s)
    block_bytes = tile_s * _LANE * (x3.dtype.itemsize + xr3.dtype.itemsize)
    vmem_limit = int(min(vmem_cap, 2 * block_bytes + 16 * _MiB))

    kernel = functools.partial(_rec_loss_kernel, fc=fc, tile_s=tile_s)

    out_shape = (
        jax.ShapeDtypeStruct((B, _SUBLANE, _LANE), jnp.float32),   # per-row masked |diff| sums
        jax.ShapeDtypeStruct((B, _SUBLANE, _LANE), jnp.float32),   # per-row nonzero counts
    )

    sums, cnts = pl.pallas_call(
        kernel,
        out_shape=out_shape,
        grid_spec=pltpu.PrefetchScalarGridSpec(
            num_scalar_prefetch=0,
            grid=(B, num_chunks),                        # reduction axis last
            in_specs=[
                pl.BlockSpec((None, tile_s, _LANE), lambda b, c: (b, c, 0)),
                pl.BlockSpec((None, tile_s, _LANE), lambda b, c: (b, c, 0)),
            ],
            out_specs=[
                pl.BlockSpec((None, _SUBLANE, _LANE), lambda b, c: (b, 0, 0)),
                pl.BlockSpec((None, _SUBLANE, _LANE), lambda b, c: (b, 0, 0)),
            ],
        ),
        compiler_params=pltpu.CompilerParams(
            dimension_semantics=("parallel", "arbitrary"),
            vmem_limit_bytes=vmem_limit,
        ),
    )(x3, xr3)

    # Tiny JAX epilogue: per-row divide and batch mean.
    row_sum = jnp.sum(sums.reshape(B, -1), axis=-1)
    row_cnt = jnp.sum(cnts.reshape(B, -1), axis=-1)
    # NOTE: a row of x that is entirely zero yields cnt == 0 -> NaN, matching the
    # torch reference's divide-by-zero behavior.
    return jnp.mean(row_sum / row_cnt)


def _reference(x_rec, x):
    """Pure-JAX transcription of the torch module."""
    B = x.shape[0]
    xf = x.reshape(B, -1).astype(jnp.float32)
    xrf = x_rec.reshape(B, -1).astype(jnp.float32)
    nz = xf != 0
    cnt = jnp.sum(nz, axis=-1, keepdims=True).astype(jnp.float32)
    mask = jnp.where(nz, 1.0, 0.0) / cnt
    rec = jnp.sum(jnp.abs(xf - xrf) * mask, axis=-1)
    return jnp.mean(rec)


if __name__ == "__main__":
    key = jax.random.PRNGKey(0)
    k1, k2, k3, k4, k5, k6 = jax.random.split(key, 6)

    # Shape implied by the module: NCHW autoencoder-style inputs.
    B, C, H, W = 2, 4, 16, 16
    x = jax.random.normal(k1, (B, C, H, W), jnp.float32)
    x = jnp.where(jax.random.uniform(k2, x.shape) < 0.2, 0.0, x)   # exercise the nonzero mask
    x_rec = jax.random.normal(k3, (B, C, H, W), jnp.float32)

    loss = reconstruction_loss(x_rec, x)
    jax.block_until_ready(loss)
    np.testing.assert_allclose(np.asarray(loss), np.asarray(_reference(x_rec, x)),
                               rtol=1e-4, atol=1e-6)

    # Second config: F = 1536 -> 12 lane-rows; with max_tile_s=8 this forces multiple
    # F-chunks per batch row plus a partial tail chunk, exercising the resident-output
    # accumulation and the iota tail-mask paths.
    B2, C2, H2, W2 = 2, 6, 16, 16
    x2 = jax.random.normal(k4, (B2, C2, H2, W2), jnp.float32)
    x2 = jnp.where(jax.random.uniform(k5, x2.shape) < 0.2, 0.0, x2)
    x2_rec = jax.random.normal(k6, (B2, C2, H2, W2), jnp.float32)

    loss2 = reconstruction_loss(x2_rec, x2, max_tile_s=8)
    jax.block_until_ready(loss2)
    np.testing.assert_allclose(np.asarray(loss2), np.asarray(_reference(x2_rec, x2)),
                               rtol=1e-4, atol=1e-6)

    print("KERNEL_OK")
</pallas_src>

<mosaic_0001>
module attributes {stable_mosaic.version = 11 : i64} {
  func.func @_rec_loss_kernel(%arg0: i32, %arg1: i32, %arg2: memref<1x8x128xf32, #tpu.memory_space<vmem>>, %arg3: memref<1x8x128xf32, #tpu.memory_space<vmem>>, %arg4: memref<1x8x128xf32, #tpu.memory_space<vmem>>, %arg5: memref<1x8x128xf32, #tpu.memory_space<vmem>>) attributes {dimension_semantics = [#tpu.dimension_semantics<parallel>, #tpu.dimension_semantics<arbitrary>], iteration_bounds = array<i64: 2, 1>, scalar_prefetch = 0 : i64, scratch_operands = 0 : i64, tpu.core_type = #tpu.core_type<tc>, window_params = [{transform_indices = @transform_0, window_bounds = array<i64: 1, 8, 128>}, {transform_indices = @transform_1, window_bounds = array<i64: 1, 8, 128>}, {transform_indices = @transform_2, window_bounds = array<i64: 1, 8, 128>}, {transform_indices = @transform_3, window_bounds = array<i64: 1, 8, 128>}]} {
    %c0_i32 = arith.constant 0 : i32
    %0 = arith.cmpi eq, %arg1, %c0_i32 : i32
    %1 = arith.extui %0 : i1 to i32
    %c0_i32_0 = arith.constant 0 : i32
    %2 = arith.cmpi ne, %1, %c0_i32_0 : i32
    scf.if %2 {
      %cst_21 = arith.constant 0.000000e+00 : f32
      %28 = vector.broadcast %cst_21 : f32 to vector<8x128xf32>
      %c0_22 = arith.constant 0 : index
      %c0_23 = arith.constant 0 : index
      %c0_24 = arith.constant 0 : index
      %29 = vector.load %arg4[%c0_22, %c0_23, %c0_24] : memref<1x8x128xf32, #tpu.memory_space<vmem>>, vector<1x8x128xf32>
      %30 = vector.shape_cast %29 : vector<1x8x128xf32> to vector<8x128xf32>
      %31 = vector.shape_cast %28 : vector<8x128xf32> to vector<1x8x128xf32>
      tpu.vector_store %arg4[%c0_22, %c0_23, %c0_24], %31 {strides = array<i32>} : memref<1x8x128xf32, #tpu.memory_space<vmem>>, vector<1x8x128xf32>,
      %cst_25 = arith.constant 0.000000e+00 : f32
      %32 = vector.broadcast %cst_25 : f32 to vector<8x128xf32>
      %c0_26 = arith.constant 0 : index
      %c0_27 = arith.constant 0 : index
      %c0_28 = arith.constant 0 : index
      %33 = vector.load %arg5[%c0_26, %c0_27, %c0_28] : memref<1x8x128xf32, #tpu.memory_space<vmem>>, vector<1x8x128xf32>
      %34 = vector.shape_cast %33 : vector<1x8x128xf32> to vector<8x128xf32>
      %35 = vector.shape_cast %32 : vector<8x128xf32> to vector<1x8x128xf32>
      tpu.vector_store %arg5[%c0_26, %c0_27, %c0_28], %35 {strides = array<i32>} : memref<1x8x128xf32, #tpu.memory_space<vmem>>, vector<1x8x128xf32>,
    } else {
    }
    %c0 = arith.constant 0 : index
    %c0_1 = arith.constant 0 : index
    %c0_2 = arith.constant 0 : index
    %3 = vector.load %arg2[%c0, %c0_1, %c0_2] : memref<1x8x128xf32, #tpu.memory_space<vmem>>, vector<1x8x128xf32>
    %4 = vector.shape_cast %3 : vector<1x8x128xf32> to vector<8x128xf32>
    %c0_3 = arith.constant 0 : index
    %c0_4 = arith.constant 0 : index
    %c0_5 = arith.constant 0 : index
    %5 = vector.load %arg3[%c0_3, %c0_4, %c0_5] : memref<1x8x128xf32, #tpu.memory_space<vmem>>, vector<1x8x128xf32>
    %6 = vector.shape_cast %5 : vector<1x8x128xf32> to vector<8x128xf32>
    %cst = arith.constant 0.000000e+00 : f32
    %7 = vector.broadcast %cst : f32 to vector<8x128xf32>
    %8 = arith.cmpf one, %4, %7 : vector<8x128xf32>
    %9 = arith.subf %4, %6 : vector<8x128xf32>
    %10 = math.absf %9 : vector<8x128xf32>
    %cst_6 = arith.constant 0.000000e+00 : f32
    %11 = vector.broadcast %cst_6 : f32 to vector<8x128xf32>
    %12 = arith.select %8, %10, %11 : vector<8x128xi1>, vector<8x128xf32>
    %cst_7 = arith.constant 1.000000e+00 : f32
    %cst_8 = arith.constant 0.000000e+00 : f32
    %13 = vector.broadcast %cst_7 : f32 to vector<8x128xf32>
    %14 = vector.broadcast %cst_8 : f32 to vector<8x128xf32>
    %15 = arith.select %8, %13, %14 : vector<8x128xi1>, vector<8x128xf32>
    %c0_9 = arith.constant 0 : index
    %c0_10 = arith.constant 0 : index
    %c0_11 = arith.constant 0 : index
    %16 = vector.load %arg4[%c0_9, %c0_10, %c0_11] : memref<1x8x128xf32, #tpu.memory_space<vmem>>, vector<1x8x128xf32>
    %17 = vector.shape_cast %16 : vector<1x8x128xf32> to vector<8x128xf32>
    %18 = arith.addf %17, %12 : vector<8x128xf32>
    %c0_12 = arith.constant 0 : index
    %c0_13 = arith.constant 0 : index
    %c0_14 = arith.constant 0 : index
    %19 = vector.load %arg4[%c0_12, %c0_13, %c0_14] : memref<1x8x128xf32, #tpu.memory_space<vmem>>, vector<1x8x128xf32>
    %20 = vector.shape_cast %19 : vector<1x8x128xf32> to vector<8x128xf32>
    %21 = vector.shape_cast %18 : vector<8x128xf32> to vector<1x8x128xf32>
    tpu.vector_store %arg4[%c0_12, %c0_13, %c0_14], %21 {strides = array<i32>} : memref<1x8x128xf32, #tpu.memory_space<vmem>>, vector<1x8x128xf32>,
    %c0_15 = arith.constant 0 : index
    %c0_16 = arith.constant 0 : index
    %c0_17 = arith.constant 0 : index
    %22 = vector.load %arg5[%c0_15, %c0_16, %c0_17] : memref<1x8x128xf32, #tpu.memory_space<vmem>>, vector<1x8x128xf32>
    %23 = vector.shape_cast %22 : vector<1x8x128xf32> to vector<8x128xf32>
    %24 = arith.addf %23, %15 : vector<8x128xf32>
    %c0_18 = arith.constant 0 : index
    %c0_19 = arith.constant 0 : index
    %c0_20 = arith.constant 0 : index
    %25 = vector.load %arg5[%c0_18, %c0_19, %c0_20] : memref<1x8x128xf32, #tpu.memory_space<vmem>>, vector<1x8x128xf32>
    %26 = vector.shape_cast %25 : vector<1x8x128xf32> to vector<8x128xf32>
    %27 = vector.shape_cast %24 : vector<8x128xf32> to vector<1x8x128xf32>
    tpu.vector_store %arg5[%c0_18, %c0_19, %c0_20], %27 {strides = array<i32>} : memref<1x8x128xf32, #tpu.memory_space<vmem>>, vector<1x8x128xf32>,
    return
  }
  func.func @transform_0(%arg0: i32, %arg1: i32) -> (i32, i32, i32) {
    %c0_i32 = arith.constant 0 : i32
    %c0_i32_0 = arith.constant 0 : i32
    return %arg0, %arg1, %c0_i32 : i32, i32, i32
  }
  func.func @transform_1(%arg0: i32, %arg1: i32) -> (i32, i32, i32) {
    %c0_i32 = arith.constant 0 : i32
    %c0_i32_0 = arith.constant 0 : i32
    return %arg0, %arg1, %c0_i32 : i32, i32, i32
  }
  func.func @transform_2(%arg0: i32, %arg1: i32) -> (i32, i32, i32) {
    %c0_i32 = arith.constant 0 : i32
    %c0_i32_0 = arith.constant 0 : i32
    %c0_i32_1 = arith.constant 0 : i32
    return %arg0, %c0_i32, %c0_i32_0 : i32, i32, i32
  }
  func.func @transform_3(%arg0: i32, %arg1: i32) -> (i32, i32, i32) {
    %c0_i32 = arith.constant 0 : i32
    %c0_i32_0 = arith.constant 0 : i32
    %c0_i32_1 = arith.constant 0 : i32
    return %arg0, %c0_i32, %c0_i32_0 : i32, i32, i32
  }
}

</mosaic_0001>

<llo_original>
// kernel: tpu_custom_call.1
$region0: #{tpu_custom_call.1}
  #allocation0 [shape = 'u32[]', space=smem, size = 0x4, offset = 0x4, fixed_abs, tag = 'smem constant byte address 0x4 - core index']
  #allocation1 [shape = 'u32[144,128]{1,0:T(1,128)}', space=vmem, size = 0x12000, scoped, tag = 'internal scratch']
  %s0 = inlined_call_operand.hbm [shape: f32[2,8,128], index: 0, kind: input, shape index: {}]
  %s1 = inlined_call_operand.hbm [shape: f32[2,8,128], index: 1, kind: input, shape index: {}]
  %s2 = inlined_call_operand.hbm [shape: f32[2,8,128], index: 2, kind: output, shape index: {0}]
  %s3 = inlined_call_operand.hbm [shape: f32[2,8,128], index: 3, kind: output, shape index: {1}]
  %4 = xla_tuple %s2, %s3
  %s5 = sld [smem:[#allocation0]]
  $region61: #{tpu_custom_call.1} parent=0
    _
  %s7 = ssub.s32 1, %s5
  %s8 = scalar_select 0, %s7, %s5
  $region1: #{tpu_custom_call.1} parent=0
    #allocation2 [shape = 'u8[8192]{0}', space=vmem, size = 0x2000, scoped, tag = 'input window, operand 0']
    #allocation3 [shape = 's32[2]{0}', space=sflag, size = 0x8, scoped, tag = 'scoped memory for tpu_custom_call.1']
    #allocation4 [shape = 's32[2]{0}', space=sflag, size = 0x8, scoped, tag = 'scoped memory for tpu_custom_call.1']
    #allocation5 [shape = 'u8[8192]{0}', space=vmem, size = 0x2000, scoped, tag = 'input window, operand 1']
    #allocation6 [shape = 's32[2]{0}', space=sflag, size = 0x8, scoped, tag = 'scoped memory for tpu_custom_call.1']
    #allocation7 [shape = 'u8[8192]{0}', space=vmem, size = 0x2000, scoped, tag = 'output window, operand 0']
    #allocation8 [shape = 'u8[8192]{0}', space=vmem, size = 0x2000, scoped, tag = 'output window, operand 1']
    #allocation9 [shape = 's32[2]{0}', space=sflag, size = 0x8, scoped, tag = 'scoped memory for tpu_custom_call.1']
    %9 = vsyncpa [#allocation3], 0
    %s10 = scalar_lea.sflag [#allocation3], 1
    %11 = vsyncpa %s10, 0
    %12 = vsyncpa [#allocation6], 0
    %s13 = scalar_lea.sflag [#allocation6], 1
    %14 = vsyncpa %s13, 0
    %15 = vsyncpa [#allocation4], 0
    %s16 = scalar_lea.sflag [#allocation4], 1
    %17 = vsyncpa %s16, 0
    %18 = vsyncpa [#allocation9], 0
    %s19 = scalar_lea.sflag [#allocation9], 1
    %20 = vsyncpa %s19, 0
    loop: start=0, step=1, limit=4
    $region2: #{tpu_custom_call.1} parent=1 // loop_pre_header
      _
    $region3: #{tpu_custom_call.1} parent=1 // loop_header
      %s22 = sphi 0, %s26
      %p23 = scmp.ge.s32.totalorder %s22, 4
      %s29 = sphi 0, %s41
      %s30 = sphi 0, %s37
      %s31 = sphi 0, %s29
      %s32 = sphi 0, %s30
      %s33 = sphi 0, %s31
      %s34 = sphi 0, %s32
      %s46 = sphi 0, %s48
      %s49 = sphi 0, %s46
      %s50 = sphi 0, %s49
      %s66 = sphi 0, %s50
      %s74 = sphi 0, %s76
      %s77 = sphi 0, %s74
      %s78 = sphi 0, %s77
      %s94 = sphi 0, %s78
      %s100 = sphi 0, %s102
      %s103 = sphi 0, %s100
      %s104 = sphi 0, %s103
      %s120 = sphi 0, %s104
      %s126 = sphi 0, %s128
      %s129 = sphi 0, %s126
      %s130 = sphi 0, %s129
      %s146 = sphi 0, %s130
    $region4: #{tpu_custom_call.1} parent=1 // loop_header_branch
      %25 = sbr.rel (%p23) target = $region8
    $region5: #{tpu_custom_call.1} parent=1 // loop_body
      %s27 = ssub.s32 %s22, 1
      %s28 = ssub.s32 %s22, 2
      %s35 = sadd.s32 1, %s30
      %p36 = scmp.ge.s32.totalorder %s35, 1
      %s37 = scalar_select %p36, 0, %s35
      %s38 = sadd.s32 1, %s29
      %s39 = scalar_select %p36, %s38, %s29
      %p40 = scmp.ge.s32.totalorder %s39, 2
      %s41 = scalar_select %p40, 0, %s39
      %s42 = ssub.s32 %s29, %s41
      %s43 = ssub.s32 %s30, %s37
      %s44 = sor.u32 %s42, %s43
      %p45 = scmp.eq.s32.totalorder %s44, 0
      %s47 = sadd.s32 %s46, 1
      %s48 = scalar_select %p45, %s46, %s47
      %p51 = pneg %p45
      %p52 = scmp.eq.s32.totalorder %s22, 1
      %p53 = por %p51, %p52
      %p54 = scmp.ne.s32.totalorder %s46, %s49
      %p55 = scmp.eq.s32.totalorder %s22, 0
      %p56 = por %p54, %p55
      %p57 = scmp.ne.s32.totalorder %s46, %s49
      %p58 = scmp.eq.s32.totalorder %s27, 1
      %p59 = por %p57, %p58
      %p60 = scmp.ne.s32.totalorder %s49, %s50
      %p61 = scmp.eq.s32.totalorder %s27, 0
      %p62 = por %p60, %p61
      %p63 = scmp.ne.s32.totalorder %s49, %s50
      %p64 = scmp.eq.s32.totalorder %s28, 1
      %p65 = por %p63, %p64
      %p67 = scmp.ne.s32.totalorder %s50, %s66
      %p68 = scmp.eq.s32.totalorder %s28, 0
      %p69 = por %p67, %p68
      %s70 = ssub.s32 %s29, %s41
      %s71 = ssub.s32 %s30, %s37
      %s72 = sor.u32 %s70, %s71
      %p73 = scmp.eq.s32.totalorder %s72, 0
      %s75 = sadd.s32 %s74, 1
      %s76 = scalar_select %p73, %s74, %s75
      %p79 = pneg %p73
      %p80 = scmp.eq.s32.totalorder %s22, 1
      %p81 = por %p79, %p80
      %p82 = scmp.ne.s32.totalorder %s74, %s77
      %p83 = scmp.eq.s32.totalorder %s22, 0
      %p84 = por %p82, %p83
      %p85 = scmp.ne.s32.totalorder %s74, %s77
      %p86 = scmp.eq.s32.totalorder %s27, 1
      %p87 = por %p85, %p86
      %p88 = scmp.ne.s32.totalorder %s77, %s78
      %p89 = scmp.eq.s32.totalorder %s27, 0
      %p90 = por %p88, %p89
      %p91 = scmp.ne.s32.totalorder %s77, %s78
      %p92 = scmp.eq.s32.totalorder %s28, 1
      %p93 = por %p91, %p92
      %p95 = scmp.ne.s32.totalorder %s78, %s94
      %p96 = scmp.eq.s32.totalorder %s28, 0
      %p97 = por %p95, %p96
      %s98 = ssub.s32 %s29, %s41
      %p99 = scmp.eq.s32.totalorder %s98, 0
      %s101 = sadd.s32 %s100, 1
      %s102 = scalar_select %p99, %s100, %s101
      %p105 = pneg %p99
      %p106 = scmp.eq.s32.totalorder %s22, 1
      %p107 = por %p105, %p106
      %p108 = scmp.ne.s32.totalorder %s100, %s103
      %p109 = scmp.eq.s32.totalorder %s22, 0
      %p110 = por %p108, %p109
      %p111 = scmp.ne.s32.totalorder %s100, %s103
      %p112 = scmp.eq.s32.totalorder %s27, 1
      %p113 = por %p111, %p112
      %p114 = scmp.ne.s32.totalorder %s103, %s104
      %p115 = scmp.eq.s32.totalorder %s27, 0
      %p116 = por %p114, %p115
      %p117 = scmp.ne.s32.totalorder %s103, %s104
      %p118 = scmp.eq.s32.totalorder %s28, 1
      %p119 = por %p117, %p118
      %p121 = scmp.ne.s32.totalorder %s104, %s120
      %p122 = scmp.eq.s32.totalorder %s28, 0
      %p123 = por %p121, %p122
      %s124 = ssub.s32 %s29, %s41
      %p125 = scmp.eq.s32.totalorder %s124, 0
      %s127 = sadd.s32 %s126, 1
      %s128 = scalar_select %p125, %s126, %s127
      %p131 = pneg %p125
      %p132 = scmp.eq.s32.totalorder %s22, 1
      %p133 = por %p131, %p132
      %p134 = scmp.ne.s32.totalorder %s126, %s129
      %p135 = scmp.eq.s32.totalorder %s22, 0
      %p136 = por %p134, %p135
      %p137 = scmp.ne.s32.totalorder %s126, %s129
      %p138 = scmp.eq.s32.totalorder %s27, 1
      %p139 = por %p137, %p138
      %p140 = scmp.ne.s32.totalorder %s129, %s130
      %p141 = scmp.eq.s32.totalorder %s27, 0
      %p142 = por %p140, %p141
      %p143 = scmp.ne.s32.totalorder %s129, %s130
      %p144 = scmp.eq.s32.totalorder %s28, 1
      %p145 = por %p143, %p144
      %p147 = scmp.ne.s32.totalorder %s130, %s146
      %p148 = scmp.eq.s32.totalorder %s28, 0
      %p149 = por %p147, %p148
      %p150 = scmp.le.s32.totalorder 1, %s22
      %p151 = scmp.lt.s32.totalorder %s22, 3
      %p152 = pnand %p150, %p151
      %p153 = pneg %p152
      // Predicated region
      $region9: #{tpu_custom_call.1} parent=5 // pred_check
        _
      $region10: #{tpu_custom_call.1} parent=5 // pred_check_branch
        %155 = sbr.rel (%p152) target = $region12
      $region11: #{tpu_custom_call.1} parent=5 // pred_region
        %s156 = ssub.s32 %s22, 1
      $region12: #{tpu_custom_call.1} parent=5 // pred_fallthru
        _
      %p157 = scmp.lt.s32.totalorder %s22, 2
      // Predicated region
      $region13: #{tpu_custom_call.1} parent=5 // pred_check
        %p158 = pneg %p157
      $region14: #{tpu_custom_call.1} parent=5 // pred_check_branch
        %160 = sbr.rel (%p158) target = $region16
      $region15: #{tpu_custom_call.1} parent=5 // pred_region
        // Predicated region
        $region17: #{tpu_custom_call.1} parent=15 // pred_check
          %p161 = pneg %p56
        $region18: #{tpu_custom_call.1} parent=15 // pred_check_branch
          %163 = sbr.rel (%p161) target = $region20
        $region19: #{tpu_custom_call.1} parent=15 // pred_region
          %s164 = sand.u32 %s46, 1
          %s165 = scalar_lea.sflag [#allocation3], %s164
          %s166 = sand.u32 %s46, 1
          %s167 = smul.addr %s166, 8
          %s168 = scalar_lea.vmem [#allocation2], %s167
          %s170 = ssub.s32 128, 128
          %171 = vsyncadd %s165, %s170
          %s172 = sadd.s32 %s30, %s29
          %s173 = smul.addr %s172, 128
          %s174 = scalar_lea.hbm %s0, %s173
          %s176 = sshll.u32 %s168, 4
          %s177 = int_to_ptr.vmem [resolvable:$true] %s176
          %179 = dma.hbm_to_vmem [thread:$0]  %s174, 128, %s177, %s165
        $region20: #{tpu_custom_call.1} parent=15 // pred_fallthru
          _
        // Predicated region
        $region21: #{tpu_custom_call.1} parent=15 // pred_check
          %p180 = pneg %p84
        $region22: #{tpu_custom_call.1} parent=15 // pred_check_branch
          %182 = sbr.rel (%p180) target = $region24
        $region23: #{tpu_custom_call.1} parent=15 // pred_region
          %s183 = sand.u32 %s74, 1
          %s184 = scalar_lea.sflag [#allocation6], %s183
          %s185 = sand.u32 %s74, 1
          %s186 = smul.addr %s185, 8
          %s187 = scalar_lea.vmem [#allocation5], %s186
          %s189 = ssub.s32 128, 128
          %190 = vsyncadd %s184, %s189
          %s191 = sadd.s32 %s30, %s29
          %s192 = smul.addr %s191, 128
          %s193 = scalar_lea.hbm %s1, %s192
          %s195 = sshll.u32 %s187, 4
          %s196 = int_to_ptr.vmem [resolvable:$true] %s195
          %198 = dma.hbm_to_vmem [thread:$0]  %s193, 128, %s196, %s184
        $region24: #{tpu_custom_call.1} parent=15 // pred_fallthru
          _
      $region16: #{tpu_custom_call.1} parent=5 // pred_fallthru
        _
      %p199 = scmp.le.s32.totalorder 1, %s22
      %p200 = scmp.lt.s32.totalorder %s22, 3
      %p201 = pnand %p199, %p200
      %p202 = pneg %p201
      // Predicated region
      $region25: #{tpu_custom_call.1} parent=5 // pred_check
        _
      $region26: #{tpu_custom_call.1} parent=5 // pred_check_branch
        %204 = sbr.rel (%p201) target = $region28
      $region27: #{tpu_custom_call.1} parent=5 // pred_region
        %s205 = ssub.s32 %s22, 1
        %s206 = sand.u32 %s49, 1
        %s207 = scalar_lea.sflag [#allocation3], %s206
        %s208 = sand.u32 %s49, 1
        %s209 = smul.addr %s208, 8
        %s210 = scalar_lea.vmem [#allocation2], %s209
        // Predicated region
        $region29: #{tpu_custom_call.1} parent=27 // pred_check
          %p211 = pneg %p62
        $region30: #{tpu_custom_call.1} parent=27 // pred_check_branch
          %213 = sbr.rel (%p211) target = $region32
        $region31: #{tpu_custom_call.1} parent=27 // pred_region
          %214 = dma.done %s207, 128
        $region32: #{tpu_custom_call.1} parent=27 // pred_fallthru
          _
        %s215 = sand.u32 %s77, 1
        %s216 = scalar_lea.sflag [#allocation6], %s215
        %s217 = sand.u32 %s77, 1
        %s218 = smul.addr %s217, 8
        %s219 = scalar_lea.vmem [#allocation5], %s218
        // Predicated region
        $region33: #{tpu_custom_call.1} parent=27 // pred_check
          %p220 = pneg %p90
        $region34: #{tpu_custom_call.1} parent=27 // pred_check_branch
          %222 = sbr.rel (%p220) target = $region36
        $region35: #{tpu_custom_call.1} parent=27 // pred_region
          %223 = dma.done %s216, 128
        $region36: #{tpu_custom_call.1} parent=27 // pred_fallthru
          _
        %s224 = sand.u32 %s49, 1
        %s225 = scalar_lea.sflag [#allocation3], %s224
        %s226 = sand.u32 %s49, 1
        %s227 = smul.addr %s226, 8
        %s228 = scalar_lea.vmem [#allocation2], %s227
        %p229 = pneg %p62
        %p230 = pneg %p59
        %s231 = sand.u32 %s77, 1
        %s232 = scalar_lea.sflag [#allocation6], %s231
        %s233 = sand.u32 %s77, 1
        %s234 = smul.addr %s233, 8
        %s235 = scalar_lea.vmem [#allocation5], %s234
        %p236 = pneg %p90
        %p237 = pneg %p87
        %p238 = pneg %p116
        %p239 = pneg %p113
        %s240 = sand.u32 %s103, 1
        %s241 = scalar_lea.sflag [#allocation4], %s240
        %s242 = sand.u32 %s103, 1
        %s243 = smul.addr %s242, 8
        %s244 = scalar_lea.vmem [#allocation7], %s243
        %p245 = pneg %p142
        %p246 = pneg %p139
        %s247 = sand.u32 %s129, 1
        %s248 = scalar_lea.sflag [#allocation9], %s247
        %s249 = sand.u32 %s129, 1
        %s250 = smul.addr %s249, 8
        %s251 = scalar_lea.vmem [#allocation8], %s250
        %p252 = scmp.eq.s32.totalorder %s32, 0
        // Predicated region
        $region37: #{tpu_custom_call.1} parent=27 // pred_check
          %p253 = pneg %p252
        $region38: #{tpu_custom_call.1} parent=27 // pred_check_branch
          %255 = sbr.rel (%p253) target = $region40
        $region39: #{tpu_custom_call.1} parent=27 // pred_region
          %256 = vst [vmem:[%s244] sm:$0xff] 0.0
          %257 = vst [vmem:[%s251] sm:$0xff] 0.0
        $region40: #{tpu_custom_call.1} parent=27 // pred_fallthru
          _
        %v258 = vld [vmem:[%s210] sm:$0xff]
        %v259 = vld [vmem:[%s219] sm:$0xff]
        %vm260 = vcmp.ne.f32.partialorder %v258, 0.0
        %v261 = vsub.f32 %v258, %v259
        %v262 = vand.u32 2147483647, %v261
        %v263 = vsel %vm260, %v262, 0.0
        %v264 = vsel %vm260, 1.0, 0.0
        %v265 = vld [vmem:[%s244] sm:$0xff]
        %v266 = vadd.f32 %v265, %v263
        %267 = vst [vmem:[%s244] sm:$0xff] %v266
        %v268 = vld [vmem:[%s251] sm:$0xff]
        %v269 = vadd.f32 %v268, %v264
        %270 = vst [vmem:[%s251] sm:$0xff] %v269
        %s271 = sand.u32 %s103, 1
        %s272 = scalar_lea.sflag [#allocation4], %s271
        %s273 = sand.u32 %s103, 1
        %s274 = smul.addr %s273, 8
        %s275 = scalar_lea.vmem [#allocation7], %s274
        %s276 = sand.u32 %s129, 1
        %s277 = scalar_lea.sflag [#allocation9], %s276
        %s278 = sand.u32 %s129, 1
        %s279 = smul.addr %s278, 8
        %s280 = scalar_lea.vmem [#allocation8], %s279
        // Predicated region
        $region41: #{tpu_custom_call.1} parent=27 // pred_check
          %p281 = pneg %p113
        $region42: #{tpu_custom_call.1} parent=27 // pred_check_branch
          %283 = sbr.rel (%p281) target = $region44
        $region43: #{tpu_custom_call.1} parent=27 // pred_region
          %s285 = ssub.s32 128, 128
          %286 = vsyncadd %s272, %s285
          %s287 = smul.addr %s31, 128
          %s288 = scalar_lea.hbm %s2, %s287
          %s290 = sshll.u32 %s275, 4
          %s291 = int_to_ptr.vmem [resolvable:$true] %s290
          %293 = dma.vmem_to_hbm [thread:$0]  %s291, 128, %s288, %s272
        $region44: #{tpu_custom_call.1} parent=27 // pred_fallthru
          _
        // Predicated region
        $region45: #{tpu_custom_call.1} parent=27 // pred_check
          %p294 = pneg %p139
        $region46: #{tpu_custom_call.1} parent=27 // pred_check_branch
          %296 = sbr.rel (%p294) target = $region48
        $region47: #{tpu_custom_call.1} parent=27 // pred_region
          %s298 = ssub.s32 128, 128
          %299 = vsyncadd %s277, %s298
          %s300 = smul.addr %s31, 128
          %s301 = scalar_lea.hbm %s3, %s300
          %s303 = sshll.u32 %s280, 4
          %s304 = int_to_ptr.vmem [resolvable:$true] %s303
          %306 = dma.vmem_to_hbm [thread:$0]  %s304, 128, %s301, %s277
        $region48: #{tpu_custom_call.1} parent=27 // pred_fallthru
          _
      $region28: #{tpu_custom_call.1} parent=5 // pred_fallthru
        _
      %p307 = scmp.le.s32.totalorder 2, %s22
      // Predicated region
      $region49: #{tpu_custom_call.1} parent=5 // pred_check
        %p308 = pneg %p307
      $region50: #{tpu_custom_call.1} parent=5 // pred_check_branch
        %310 = sbr.rel (%p308) target = $region52
      $region51: #{tpu_custom_call.1} parent=5 // pred_region
        %s311 = ssub.s32 %s22, 2
        // Predicated region
        $region53: #{tpu_custom_call.1} parent=51 // pred_check
          %p312 = pneg %p119
        $region54: #{tpu_custom_call.1} parent=51 // pred_check_branch
          %314 = sbr.rel (%p312) target = $region56
        $region55: #{tpu_custom_call.1} parent=51 // pred_region
          %s315 = sand.u32 %s104, 1
          %s316 = scalar_lea.sflag [#allocation4], %s315
          %s317 = sand.u32 %s104, 1
          %s318 = smul.addr %s317, 8
          %s319 = scalar_lea.vmem [#allocation7], %s318
          %320 = dma.done %s316, 128
        $region56: #{tpu_custom_call.1} parent=51 // pred_fallthru
          _
        // Predicated region
        $region57: #{tpu_custom_call.1} parent=51 // pred_check
          %p321 = pneg %p145
        $region58: #{tpu_custom_call.1} parent=51 // pred_check_branch
          %323 = sbr.rel (%p321) target = $region60
        $region59: #{tpu_custom_call.1} parent=51 // pred_region
          %s324 = sand.u32 %s130, 1
          %s325 = scalar_lea.sflag [#allocation9], %s324
          %s326 = sand.u32 %s130, 1
          %s327 = smul.addr %s326, 8
          %s328 = scalar_lea.vmem [#allocation8], %s327
          %329 = dma.done %s325, 128
        $region60: #{tpu_custom_call.1} parent=51 // pred_fallthru
          _
      $region52: #{tpu_custom_call.1} parent=5 // pred_fallthru
        _
    $region6: #{tpu_custom_call.1} parent=1 // loop_footer
      %s26 = sadd.s32 1, %s22
    $region7: #{tpu_custom_call.1} parent=1 // loop_footer_branch
      %21 = sbr.rel target = $region3
    $region8: #{tpu_custom_call.1} parent=1 // loop_exit
      _
    %330 = vsyncpa [#allocation3], 1
    %s331 = scalar_lea.sflag [#allocation3], 1
    %332 = vsyncpa %s331, 1
    %333 = vsyncpa [#allocation6], 1
    %s334 = scalar_lea.sflag [#allocation6], 1
    %335 = vsyncpa %s334, 1
    %336 = vsyncpa [#allocation4], 1
    %s337 = scalar_lea.sflag [#allocation4], 1
    %338 = vsyncpa %s337, 1
    %339 = vsyncpa [#allocation9], 1
    %s340 = scalar_lea.sflag [#allocation9], 1
    %341 = vsyncpa %s340, 1

</llo_original>
